<compile_context>
chip_gen: v7x
topology: tpu7x:2x2x1
jax: 0.10.0
libtpu: 0.0.40
codegen_flags: <defaults>
</compile_context>

<pallas_src>
import jax
import jax.numpy as jnp
from jax.experimental import pallas as pl
from jax.experimental.pallas import tpu as pltpu


def _shape_copy_kernel(dims_ref, out_ref):
    # dims_ref / out_ref: 1-D int32 arrays in SMEM (length = number of
    # reported dims, statically known, <= rank of the input).  Copy with a
    # tiny fully-unrolled static scalar loop — SMEM is scalar load/store
    # only, and the trip count is at most a handful of elements.
    for i in range(out_ref.shape[0]):
        out_ref[i] = dims_ref[i]


def onnx_shape(x, start=None, end=None):
    """Default (fast) OnnxShape: shape is static at trace time, so just
    return it as a traced constant — zero device work, no kernel launch."""
    dims = x.shape[start:end]
    return jnp.asarray(dims, dtype=jnp.int32)


def onnx_shape_pallas(x, start=None, end=None):
    """Pallas-kernel variant, kept only for when an on-device op is required.

    The kernel never reads `x`; it just materializes the statically-known
    (sliced) dims from SMEM into the SMEM output buffer.
    """
    dims = x.shape[start:end]
    n = len(dims)
    if n == 0:
        # Empty slice: nothing to run on-device.
        return jnp.zeros((0,), dtype=jnp.int32)

    dims_arr = jnp.asarray(dims, dtype=jnp.int32)

    return pl.pallas_call(
        _shape_copy_kernel,
        out_shape=jax.ShapeDtypeStruct((n,), jnp.int32),
        in_specs=[pl.BlockSpec(memory_space=pltpu.SMEM)],
        out_specs=pl.BlockSpec(memory_space=pltpu.SMEM),
    )(dims_arr)


class OnnxShapePallas:
    """Mirror of the PyTorch OnnxShape module.

    By default uses the constant fast path (recommended).  Set
    `use_pallas_kernel=True` to force the on-device SMEM copy kernel.
    """

    def __init__(self, start=None, end=None, use_pallas_kernel=False):
        self.start = start
        self.end = end
        self.use_pallas_kernel = use_pallas_kernel

    def __call__(self, input_tensor):
        fn = onnx_shape_pallas if self.use_pallas_kernel else onnx_shape
        return fn(input_tensor, self.start, self.end)


if __name__ == "__main__":
    key = jax.random.PRNGKey(0)
    x = jax.random.normal(key, (2, 4, 16, 16), dtype=jnp.float32)  # NCHW

    # --- Fast (constant) path: this is what the module uses by default ---
    out_full = jax.block_until_ready(OnnxShapePallas()(x))
    assert out_full.tolist() == [2, 4, 16, 16], out_full
    assert out_full.dtype == jnp.int32

    out_slice = jax.block_until_ready(OnnxShapePallas(start=1)(x))
    assert out_slice.tolist() == [4, 16, 16], out_slice

    out_win = jax.block_until_ready(OnnxShapePallas(start=1, end=3)(x))
    assert out_win.tolist() == [4, 16], out_win

    out_neg = jax.block_until_ready(OnnxShapePallas(start=-2)(x))
    assert out_neg.tolist() == [16, 16], out_neg

    # --- Pallas-kernel path (on-device SMEM copy, exercised for validation) ---
    out_k_full = jax.block_until_ready(OnnxShapePallas(use_pallas_kernel=True)(x))
    assert out_k_full.tolist() == [2, 4, 16, 16], out_k_full
    assert out_k_full.dtype == jnp.int32

    out_k_win = jax.block_until_ready(
        OnnxShapePallas(start=1, end=3, use_pallas_kernel=True)(x)
    )
    assert out_k_win.tolist() == [4, 16], out_k_win

    print("KERNEL_OK")
</pallas_src>

<mosaic_0001>
module attributes {stable_mosaic.version = 11 : i64} {
  func.func @_shape_copy_kernel(%arg0: memref<4xi32, #tpu.memory_space<smem>>, %arg1: memref<4xi32, #tpu.memory_space<smem>>) attributes {dimension_semantics = [], scalar_prefetch = 0 : i64, scratch_operands = 0 : i64, tpu.core_type = #tpu.core_type<tc>} {
    %c0 = arith.constant 0 : index
    %0 = memref.load %arg0[%c0] : memref<4xi32, #tpu.memory_space<smem>>
    %c0_0 = arith.constant 0 : index
    %1 = memref.load %arg1[%c0_0] : memref<4xi32, #tpu.memory_space<smem>>
    memref.store %0, %arg1[%c0_0] : memref<4xi32, #tpu.memory_space<smem>>
    %c1 = arith.constant 1 : index
    %2 = memref.load %arg0[%c1] : memref<4xi32, #tpu.memory_space<smem>>
    %c1_1 = arith.constant 1 : index
    %3 = memref.load %arg1[%c1_1] : memref<4xi32, #tpu.memory_space<smem>>
    memref.store %2, %arg1[%c1_1] : memref<4xi32, #tpu.memory_space<smem>>
    %c2 = arith.constant 2 : index
    %4 = memref.load %arg0[%c2] : memref<4xi32, #tpu.memory_space<smem>>
    %c2_2 = arith.constant 2 : index
    %5 = memref.load %arg1[%c2_2] : memref<4xi32, #tpu.memory_space<smem>>
    memref.store %4, %arg1[%c2_2] : memref<4xi32, #tpu.memory_space<smem>>
    %c3 = arith.constant 3 : index
    %6 = memref.load %arg0[%c3] : memref<4xi32, #tpu.memory_space<smem>>
    %c3_3 = arith.constant 3 : index
    %7 = memref.load %arg1[%c3_3] : memref<4xi32, #tpu.memory_space<smem>>
    memref.store %6, %arg1[%c3_3] : memref<4xi32, #tpu.memory_space<smem>>
    return
  }
}

</mosaic_0001>

<llo_original>
// kernel: tpu_custom_call.1
$region0: #{tpu_custom_call.1}
  #allocation0 [shape = 'u32[]', space=smem, size = 0x4, offset = 0x4, fixed_abs, tag = 'smem constant byte address 0x4 - core index']
  #allocation1 [shape = 'u32[144,128]{1,0:T(1,128)}', space=vmem, size = 0x12000, scoped, tag = 'internal scratch']
  %s0 = inlined_call_operand.hbm [shape: s32[4], index: 0, kind: input, shape index: {}]
  %s1 = inlined_call_operand.hbm [shape: s32[4], index: 1, kind: output, shape index: {}]
  %s2 = sld [smem:[#allocation0]]
  $region18: #{tpu_custom_call.1} parent=0
    _
  %s4 = ssub.s32 1, %s2
  %s5 = scalar_select 0, %s4, %s2
  $region1: #{tpu_custom_call.1} parent=0
    #allocation2 [shape = 'u8[512]{0}', space=smem, size = 0x200, scoped, tag = 'input window, operand 0, single buffered']
    #allocation3 [shape = 's32[1]{0}', space=sflag, size = 0x4, scoped, tag = 'scoped memory for tpu_custom_call.1']
    #allocation4 [shape = 's32[1]{0}', space=sflag, size = 0x4, scoped, tag = 'scoped memory for tpu_custom_call.1']
    #allocation5 [shape = 'u8[512]{0}', space=smem, size = 0x200, scoped, tag = 'output window, operand 0, single buffered']
    %6 = vsyncpa [#allocation3], 0
    %7 = vsyncpa [#allocation4], 0
    // Predicated region
    $region2: #{tpu_custom_call.1} parent=1 // pred_check
      _
    $region3: #{tpu_custom_call.1} parent=1 // pred_check_branch
      %9 = sbr.rel (0) target = $region5
    $region4: #{tpu_custom_call.1} parent=1 // pred_region
      %s11 = ssub.s32 16, 16
      %12 = vsyncadd [#allocation3], %s11
      %15 = dma.hbm_to_smem %s0, 16, [#allocation2], [#allocation3]
    $region5: #{tpu_custom_call.1} parent=1 // pred_fallthru
      _
    // Predicated region
    $region6: #{tpu_custom_call.1} parent=1 // pred_check
      _
    $region7: #{tpu_custom_call.1} parent=1 // pred_check_branch
      %17 = sbr.rel (0) target = $region9
    $region8: #{tpu_custom_call.1} parent=1 // pred_region
      %18 = dma.done [#allocation3], 16
    $region9: #{tpu_custom_call.1} parent=1 // pred_fallthru
      _
    %19 = sfence
    %s20 = sld [smem:[#allocation2]]
    %s21 = scalar_lea.smem [#allocation5], 0
    %22 = sst [smem:[%s21]] %s20
    %s23 = sld [smem:[#allocation2 + $0x1]]
    %s24 = scalar_lea.smem [#allocation5], 1
    %25 = sst [smem:[%s24]] %s23
    %s26 = sld [smem:[#allocation2 + $0x2]]
    %s27 = scalar_lea.smem [#allocation5], 2
    %28 = sst [smem:[%s27]] %s26
    %s29 = sld [smem:[#allocation2 + $0x3]]
    %s30 = scalar_lea.smem [#allocation5], 3
    %31 = sst [smem:[%s30]] %s29
    // Predicated region
    $region10: #{tpu_custom_call.1} parent=1 // pred_check
      _
    $region11: #{tpu_custom_call.1} parent=1 // pred_check_branch
      %33 = sbr.rel (0) target = $region13
    $region12: #{tpu_custom_call.1} parent=1 // pred_region
      %s35 = ssub.s32 16, 16
      %36 = vsyncadd [#allocation4], %s35
      %39 = dma.smem_to_hbm [#allocation5], 16, %s1, [#allocation4]
    $region13: #{tpu_custom_call.1} parent=1 // pred_fallthru
      _
    // Predicated region
    $region14: #{tpu_custom_call.1} parent=1 // pred_check
      _
    $region15: #{tpu_custom_call.1} parent=1 // pred_check_branch
      %41 = sbr.rel (0) target = $region17
    $region16: #{tpu_custom_call.1} parent=1 // pred_region
      %42 = dma.done [#allocation4], 16
    $region17: #{tpu_custom_call.1} parent=1 // pred_fallthru
      _
    %43 = sfence
    %44 = vsyncpa [#allocation3], 1
    %45 = vsyncpa [#allocation4], 1

</llo_original>
